<compile_context>
chip_gen: v6e
topology: v6e:2x2x1
jax: 0.10.0
libtpu: 0.0.40
codegen_flags: <defaults>
</compile_context>

<pallas_src>
import jax
import jax.numpy as jnp
from jax import lax
from jax.experimental import pallas as pl
from jax.experimental.pallas import tpu as pltpu


# ---------------------------------------------------------------------------
# Pallas kernel: fused (im2col-matmul with BN scale pre-folded) + shift + ReLU
# ---------------------------------------------------------------------------
def _fused_matmul_bn_relu_kernel(xcols_ref, w_ref, shift_ref, o_ref):
    # xcols_ref: (1, K, TS)     im2col patches for this (batch, spatial) tile
    # w_ref:     (Cout, K)      conv weight with BN scale folded in (K = 27*Cin)
    # shift_ref: (Cout, 1)      BN shift (beta - mean * scale)
    # o_ref:     (1, Cout, TS)  lane-dense output tile (spatial on lanes)
    acc = jnp.dot(w_ref[...], xcols_ref[0],
                  preferred_element_type=jnp.float32)        # (Cout, TS) on MXU
    y = jnp.maximum(acc + shift_ref[...], 0.0)               # BN shift + ReLU
    o_ref[0] = y.astype(o_ref.dtype)


# ---------------------------------------------------------------------------
# Wrapper helpers
# ---------------------------------------------------------------------------
def _pick_spatial_tile(s_total, k, cout, *, vmem_budget_bytes=16 << 20,
                       max_tile=2048):
    """Largest multiple of 128 dividing s_total that fits the VMEM budget.

    Budget counts the double-buffered im2col input block plus the output
    block (f32).  Falls back to the full extent (always a legal block)."""
    if s_total % 128 != 0:
        return s_total
    bytes_per_col = 4 * 2 * (k + cout)          # double-buffered, per lane column
    budget_tile = max(128, (vmem_budget_bytes // bytes_per_col) // 128 * 128)
    t = min(budget_tile, max_tile, s_total)
    t -= t % 128
    while t >= 128:
        if s_total % t == 0:
            return t
        t -= 128
    return s_total


def _im2col_3d_k3p1(x, stride):
    """(N, Cin, D, H, W) -> ((N, 27*Cin, Do*Ho*Wo), (Do, Ho, Wo)).

    Patches for a 3x3x3 conv with padding=1 and the given stride; row order
    is (kd, kh, kw, ci), matching the weight reshape below."""
    n, cin, d, h, w = x.shape
    do = (d - 1) // stride + 1
    ho = (h - 1) // stride + 1
    wo = (w - 1) // stride + 1
    xp = jnp.pad(x, ((0, 0), (0, 0), (1, 1), (1, 1), (1, 1)))
    taps = []
    for kd in range(3):
        for kh in range(3):
            for kw in range(3):
                taps.append(
                    xp[:, :,
                       kd:kd + (do - 1) * stride + 1:stride,
                       kh:kh + (ho - 1) * stride + 1:stride,
                       kw:kw + (wo - 1) * stride + 1:stride])
    xcols = jnp.stack(taps, axis=1)                 # (N, 27, Cin, Do, Ho, Wo)
    xcols = xcols.reshape(n, 27 * cin, do * ho * wo)
    return xcols, (do, ho, wo)


def conv3x3_bn_relu(x, weight, gamma, beta, running_mean, running_var,
                    *, stride, eps=1e-5):
    """One ConvResNet stage + block activation (Conv3d -> BN3d -> ReLU).

    x:      (N, Cin, D, H, W) float32 (PyTorch NCDHW layout)
    weight: (Cout, Cin, 3, 3, 3) float32
    Returns (N, Cout, Do, Ho, Wo) float32, NCDHW layout.
    """
    n, cin, _, _, _ = x.shape
    cout = weight.shape[0]

    xcols, (do, ho, wo) = _im2col_3d_k3p1(x, stride)        # (N, K, S)
    k = 27 * cin
    s_total = do * ho * wo

    # (Cout, Cin, kd, kh, kw) -> (Cout, kd, kh, kw, Cin) -> (Cout, 27*Cin)
    w2d = jnp.transpose(weight, (0, 2, 3, 4, 1)).reshape(cout, k)

    # Fold BN scale into the weight; kernel only adds the shift.
    scale = gamma / jnp.sqrt(running_var + eps)              # (Cout,)
    w_fused = (w2d * scale[:, None]).astype(jnp.float32)     # (Cout, K)
    shift = (beta - running_mean * scale).reshape(cout, 1)   # (Cout, 1)
    shift = shift.astype(jnp.float32)

    ts = _pick_spatial_tile(s_total, k, cout)
    grid = (n, s_total // ts)

    out = pl.pallas_call(
        _fused_matmul_bn_relu_kernel,
        out_shape=jax.ShapeDtypeStruct((n, cout, s_total), jnp.float32),
        grid_spec=pltpu.PrefetchScalarGridSpec(
            num_scalar_prefetch=0,
            grid=grid,
            in_specs=[
                pl.BlockSpec((1, k, ts), lambda b, t: (b, 0, t)),
                pl.BlockSpec((cout, k), lambda b, t: (0, 0)),
                pl.BlockSpec((cout, 1), lambda b, t: (0, 0)),
            ],
            out_specs=pl.BlockSpec((1, cout, ts), lambda b, t: (b, 0, t)),
        ),
        compiler_params=pltpu.CompilerParams(
            dimension_semantics=("parallel", "parallel")),
    )(xcols, w_fused, shift)

    # Free reshape (no transpose): output is already channel-major with the
    # spatial dim flattened in D*H*W order.
    return out.reshape(n, cout, do, ho, wo)


def convolutional_resnet_block_forward(x, params, eps=1e-5):
    """conv1(stride=2)+BN+ReLU -> conv2(stride=1)+BN+ReLU (NCDHW in/out)."""
    w1, g1, b1, m1, v1 = params["conv1"]
    w2, g2, b2, m2, v2 = params["conv2"]
    y = conv3x3_bn_relu(x, w1, g1, b1, m1, v1, stride=2, eps=eps)
    y = conv3x3_bn_relu(y, w2, g2, b2, m2, v2, stride=1, eps=eps)
    return y


# ---------------------------------------------------------------------------
# Pure-JAX reference (lax conv) for correctness checking
# ---------------------------------------------------------------------------
def _reference_stage(x, weight, gamma, beta, mean, var, *, stride, eps=1e-5):
    y = lax.conv_general_dilated(
        x, weight,
        window_strides=(stride, stride, stride),
        padding=((1, 1), (1, 1), (1, 1)),
        dimension_numbers=("NCDHW", "OIDHW", "NCDHW"))
    scale = (gamma / jnp.sqrt(var + eps)).reshape(1, -1, 1, 1, 1)
    shift = (beta - mean * gamma / jnp.sqrt(var + eps)).reshape(1, -1, 1, 1, 1)
    return jnp.maximum(y * scale + shift, 0.0)


def reference_forward(x, params, eps=1e-5):
    w1, g1, b1, m1, v1 = params["conv1"]
    w2, g2, b2, m2, v2 = params["conv2"]
    y = _reference_stage(x, w1, g1, b1, m1, v1, stride=2, eps=eps)
    return _reference_stage(y, w2, g2, b2, m2, v2, stride=1, eps=eps)


# ---------------------------------------------------------------------------
# Demo / self-test
# ---------------------------------------------------------------------------
if __name__ == "__main__":
    N, Cin, Cout, D, H, W = 2, 4, 8, 16, 16, 16
    K3 = 3

    key = jax.random.PRNGKey(0)
    kx, kw1, kw2 = jax.random.split(key, 3)

    x = jax.random.normal(kx, (N, Cin, D, H, W), dtype=jnp.float32)

    def xavier_uniform(k, shape):
        co, ci, kd, kh, kw = shape
        fan_in = ci * kd * kh * kw
        fan_out = co * kd * kh * kw
        bound = (6.0 / (fan_in + fan_out)) ** 0.5
        return jax.random.uniform(k, shape, jnp.float32, -bound, bound)

    # Conv weights (xavier_uniform init, no bias because use_batchnorm=True).
    w1 = xavier_uniform(kw1, (Cout, Cin, K3, K3, K3))
    w2 = xavier_uniform(kw2, (Cout, Cout, K3, K3, K3))

    # BatchNorm3d fresh-init parameters (inference-mode running stats).
    def bn_fresh(c):
        return (jnp.ones((c,), jnp.float32), jnp.zeros((c,), jnp.float32),
                jnp.zeros((c,), jnp.float32), jnp.ones((c,), jnp.float32))

    g1, b1, m1, v1 = bn_fresh(Cout)
    g2, b2, m2, v2 = bn_fresh(Cout)

    params = {"conv1": (w1, g1, b1, m1, v1),
              "conv2": (w2, g2, b2, m2, v2)}

    out = convolutional_resnet_block_forward(x, params)
    out = jax.block_until_ready(out)

    ref = reference_forward(x, params)
    assert out.shape == (N, Cout, 8, 8, 8), out.shape
    max_err = float(jnp.max(jnp.abs(out - ref)))
    assert jnp.allclose(out, ref, atol=1e-3, rtol=1e-3), (
        f"max abs err = {max_err}")

    print("KERNEL_OK")
</pallas_src>

<mosaic_0001>
module attributes {stable_mosaic.version = 11 : i64} {
  func.func @_fused_matmul_bn_relu_kernel(%arg0: i32, %arg1: i32, %arg2: memref<1x108x512xf32, #tpu.memory_space<vmem>>, %arg3: memref<8x108xf32, #tpu.memory_space<vmem>>, %arg4: memref<8x1xf32, #tpu.memory_space<vmem>>, %arg5: memref<1x8x512xf32, #tpu.memory_space<vmem>>) attributes {dimension_semantics = [#tpu.dimension_semantics<parallel>, #tpu.dimension_semantics<parallel>], iteration_bounds = array<i64: 2, 1>, scalar_prefetch = 0 : i64, scratch_operands = 0 : i64, tpu.core_type = #tpu.core_type<tc>, window_params = [{transform_indices = @transform_0, window_bounds = array<i64: 1, 108, 512>}, {pipeline_mode = #tpu.pipeline_mode<synchronous>, transform_indices = @transform_1, window_bounds = array<i64: 8, 108>}, {pipeline_mode = #tpu.pipeline_mode<synchronous>, transform_indices = @transform_2, window_bounds = array<i64: 8, 1>}, {transform_indices = @transform_3, window_bounds = array<i64: 1, 8, 512>}]} {
    %c0 = arith.constant 0 : index
    %c0_0 = arith.constant 0 : index
    %0 = vector.load %arg3[%c0, %c0_0] : memref<8x108xf32, #tpu.memory_space<vmem>>, vector<8x108xf32>
    %c0_1 = arith.constant 0 : index
    %c0_2 = arith.constant 0 : index
    %c0_3 = arith.constant 0 : index
    %1 = vector.load %arg2[%c0_1, %c0_2, %c0_3] : memref<1x108x512xf32, #tpu.memory_space<vmem>>, vector<1x108x512xf32>
    %2 = vector.shape_cast %1 : vector<1x108x512xf32> to vector<108x512xf32>
    %cst = arith.constant dense<0.000000e+00> : vector<8x512xf32>
    %3 = tpu.matmul %0, %2, %cst {dimension_numbers = #tpu.dot_dimension_numbers<[1], [0], [0], [1], [0, 0, 1, 1], [], []>} : vector<8x108xf32>, vector<108x512xf32>, vector<8x512xf32> -> vector<8x512xf32>
    %c0_4 = arith.constant 0 : index
    %c0_5 = arith.constant 0 : index
    %4 = vector.load %arg4[%c0_4, %c0_5] : memref<8x1xf32, #tpu.memory_space<vmem>>, vector<8x1xf32>
    %5 = vector.broadcast %4 : vector<8x1xf32> to vector<8x512xf32>
    %6 = arith.addf %3, %5 : vector<8x512xf32>
    %cst_6 = arith.constant 0.000000e+00 : f32
    %7 = vector.broadcast %cst_6 : f32 to vector<8x512xf32>
    %8 = arith.maximumf %6, %7 : vector<8x512xf32>
    %c0_7 = arith.constant 0 : index
    %c0_8 = arith.constant 0 : index
    %c0_9 = arith.constant 0 : index
    %9 = vector.load %arg5[%c0_7, %c0_8, %c0_9] : memref<1x8x512xf32, #tpu.memory_space<vmem>>, vector<1x8x512xf32>
    %10 = vector.shape_cast %9 : vector<1x8x512xf32> to vector<8x512xf32>
    %11 = vector.shape_cast %8 : vector<8x512xf32> to vector<1x8x512xf32>
    tpu.vector_store %arg5[%c0_7, %c0_8, %c0_9], %11 {strides = array<i32>} : memref<1x8x512xf32, #tpu.memory_space<vmem>>, vector<1x8x512xf32>,
    return
  }
  func.func @transform_0(%arg0: i32, %arg1: i32) -> (i32, i32, i32) {
    %c0_i32 = arith.constant 0 : i32
    %c0_i32_0 = arith.constant 0 : i32
    return %arg0, %c0_i32, %arg1 : i32, i32, i32
  }
  func.func @transform_1(%arg0: i32, %arg1: i32) -> (i32, i32) {
    %c0_i32 = arith.constant 0 : i32
    %c0_i32_0 = arith.constant 0 : i32
    %c0_i32_1 = arith.constant 0 : i32
    return %c0_i32, %c0_i32_0 : i32, i32
  }
  func.func @transform_2(%arg0: i32, %arg1: i32) -> (i32, i32) {
    %c0_i32 = arith.constant 0 : i32
    %c0_i32_0 = arith.constant 0 : i32
    %c0_i32_1 = arith.constant 0 : i32
    return %c0_i32, %c0_i32_0 : i32, i32
  }
  func.func @transform_3(%arg0: i32, %arg1: i32) -> (i32, i32, i32) {
    %c0_i32 = arith.constant 0 : i32
    %c0_i32_0 = arith.constant 0 : i32
    return %arg0, %c0_i32, %arg1 : i32, i32, i32
  }
}

</mosaic_0001>

<llo_original>
// kernel: tpu_custom_call.1
$region0: #{tpu_custom_call.1}
  #allocation0 [shape = 'u32[]', space=smem, size = 0x4, offset = 0x4, fixed_abs, tag = 'smem constant byte address 0x4 - core index']
  #allocation1 [shape = 'u32[144,128]{1,0:T(1,128)}', space=vmem, size = 0x12000, scoped, tag = 'internal scratch']
  %s0 = inlined_call_operand.vmem [shape: f32[2,108,512], index: 0, kind: input, shape index: {}]
  %s1 = inlined_call_operand.vmem [shape: f32[8,108], index: 1, kind: input, shape index: {}]
  %s2 = inlined_call_operand.vmem [shape: f32[8,1], index: 2, kind: input, shape index: {}]
  %s3 = inlined_call_operand.hbm [shape: f32[2,8,512], index: 3, kind: output, shape index: {}]
  %s4 = sld [smem:[#allocation0]]
  $region45: #{tpu_custom_call.1} parent=0
    _
  %s6 = ssub.s32 1, %s4
  %s7 = scalar_select 0, %s6, %s4
  $region1: #{tpu_custom_call.1} parent=0
    #allocation2 [shape = 'u8[32768]{0}', space=vmem, size = 0x8000, scoped, tag = 'output window, operand 0']
    #allocation3 [shape = 's32[2]{0}', space=sflag, size = 0x8, scoped, tag = 'scoped memory for tpu_custom_call.1']
    %8 = vsyncpa [#allocation3], 0
    %s9 = scalar_lea.sflag [#allocation3], 1
    %10 = vsyncpa %s9, 0
    loop: start=0, step=1, limit=4
    $region2: #{tpu_custom_call.1} parent=1 // loop_pre_header
      _
    $region3: #{tpu_custom_call.1} parent=1 // loop_header
      %s12 = sphi 0, %s16
      %p13 = scmp.ge.s32.totalorder %s12, 4
      %s19 = sphi 0, %s31
      %s20 = sphi 0, %s27
      %s21 = sphi 0, %s19
      %s22 = sphi 0, %s20
      %s23 = sphi 0, %s21
      %s24 = sphi 0, %s22
      %s36 = sphi 0, %s38
      %s39 = sphi 0, %s36
      %s40 = sphi 0, %s39
      %s56 = sphi 0, %s40
      %s60 = sphi 0, %s60
      %s62 = sphi 0, %s60
      %s63 = sphi 0, %s62
      %s77 = sphi 0, %s63
      %s81 = sphi 0, %s81
      %s83 = sphi 0, %s81
      %s84 = sphi 0, %s83
      %s98 = sphi 0, %s84
      %s106 = sphi 0, %s108
      %s109 = sphi 0, %s106
      %s110 = sphi 0, %s109
      %s126 = sphi 0, %s110
    $region4: #{tpu_custom_call.1} parent=1 // loop_header_branch
      %15 = sbr.rel (%p13) target = $region8
    $region5: #{tpu_custom_call.1} parent=1 // loop_body
      %s17 = ssub.s32 %s12, 1
      %s18 = ssub.s32 %s12, 2
      %s25 = sadd.s32 1, %s20
      %p26 = scmp.ge.s32.totalorder %s25, 1
      %s27 = scalar_select %p26, 0, %s25
      %s28 = sadd.s32 1, %s19
      %s29 = scalar_select %p26, %s28, %s19
      %p30 = scmp.ge.s32.totalorder %s29, 2
      %s31 = scalar_select %p30, 0, %s29
      %s32 = ssub.s32 %s19, %s31
      %s33 = ssub.s32 %s20, %s27
      %s34 = sor.u32 %s32, %s33
      %p35 = scmp.eq.s32.totalorder %s34, 0
      %s37 = sadd.s32 %s36, 1
      %s38 = scalar_select %p35, %s36, %s37
      %p41 = pneg %p35
      %p42 = scmp.eq.s32.totalorder %s12, 1
      %p43 = por %p41, %p42
      %p44 = scmp.ne.s32.totalorder %s36, %s39
      %p45 = scmp.eq.s32.totalorder %s12, 0
      %p46 = por %p44, %p45
      %p47 = scmp.ne.s32.totalorder %s36, %s39
      %p48 = scmp.eq.s32.totalorder %s17, 1
      %p49 = por %p47, %p48
      %p50 = scmp.ne.s32.totalorder %s39, %s40
      %p51 = scmp.eq.s32.totalorder %s17, 0
      %p52 = por %p50, %p51
      %p53 = scmp.ne.s32.totalorder %s39, %s40
      %p54 = scmp.eq.s32.totalorder %s18, 1
      %p55 = por %p53, %p54
      %p57 = scmp.ne.s32.totalorder %s40, %s56
      %p58 = scmp.eq.s32.totalorder %s18, 0
      %p59 = por %p57, %p58
      %s61 = sadd.s32 %s60, 1
      %p64 = scmp.eq.s32.totalorder %s12, 1
      %p65 = scmp.ne.s32.totalorder %s60, %s62
      %p66 = scmp.eq.s32.totalorder %s12, 0
      %p67 = por %p65, %p66
      %p68 = scmp.ne.s32.totalorder %s60, %s62
      %p69 = scmp.eq.s32.totalorder %s17, 1
      %p70 = por %p68, %p69
      %p71 = scmp.ne.s32.totalorder %s62, %s63
      %p72 = scmp.eq.s32.totalorder %s17, 0
      %p73 = por %p71, %p72
      %p74 = scmp.ne.s32.totalorder %s62, %s63
      %p75 = scmp.eq.s32.totalorder %s18, 1
      %p76 = por %p74, %p75
      %p78 = scmp.ne.s32.totalorder %s63, %s77
      %p79 = scmp.eq.s32.totalorder %s18, 0
      %p80 = por %p78, %p79
      %s82 = sadd.s32 %s81, 1
      %p85 = scmp.eq.s32.totalorder %s12, 1
      %p86 = scmp.ne.s32.totalorder %s81, %s83
      %p87 = scmp.eq.s32.totalorder %s12, 0
      %p88 = por %p86, %p87
      %p89 = scmp.ne.s32.totalorder %s81, %s83
      %p90 = scmp.eq.s32.totalorder %s17, 1
      %p91 = por %p89, %p90
      %p92 = scmp.ne.s32.totalorder %s83, %s84
      %p93 = scmp.eq.s32.totalorder %s17, 0
      %p94 = por %p92, %p93
      %p95 = scmp.ne.s32.totalorder %s83, %s84
      %p96 = scmp.eq.s32.totalorder %s18, 1
      %p97 = por %p95, %p96
      %p99 = scmp.ne.s32.totalorder %s84, %s98
      %p100 = scmp.eq.s32.totalorder %s18, 0
      %p101 = por %p99, %p100
      %s102 = ssub.s32 %s19, %s31
      %s103 = ssub.s32 %s20, %s27
      %s104 = sor.u32 %s102, %s103
      %p105 = scmp.eq.s32.totalorder %s104, 0
      %s107 = sadd.s32 %s106, 1
      %s108 = scalar_select %p105, %s106, %s107
      %p111 = pneg %p105
      %p112 = scmp.eq.s32.totalorder %s12, 1
      %p113 = por %p111, %p112
      %p114 = scmp.ne.s32.totalorder %s106, %s109
      %p115 = scmp.eq.s32.totalorder %s12, 0
      %p116 = por %p114, %p115
      %p117 = scmp.ne.s32.totalorder %s106, %s109
      %p118 = scmp.eq.s32.totalorder %s17, 1
      %p119 = por %p117, %p118
      %p120 = scmp.ne.s32.totalorder %s109, %s110
      %p121 = scmp.eq.s32.totalorder %s17, 0
      %p122 = por %p120, %p121
      %p123 = scmp.ne.s32.totalorder %s109, %s110
      %p124 = scmp.eq.s32.totalorder %s18, 1
      %p125 = por %p123, %p124
      %p127 = scmp.ne.s32.totalorder %s110, %s126
      %p128 = scmp.eq.s32.totalorder %s18, 0
      %p129 = por %p127, %p128
      %p130 = scmp.le.s32.totalorder 1, %s12
      %p131 = scmp.lt.s32.totalorder %s12, 3
      %p132 = pnand %p130, %p131
      %p133 = pneg %p132
      // Predicated region
      $region9: #{tpu_custom_call.1} parent=5 // pred_check
        _
      $region10: #{tpu_custom_call.1} parent=5 // pred_check_branch
        %135 = sbr.rel (%p132) target = $region12
      $region11: #{tpu_custom_call.1} parent=5 // pred_region
        %s136 = ssub.s32 %s12, 1
        // Predicated region
        $region13: #{tpu_custom_call.1} parent=11 // pred_check
          %p137 = pneg %p73
        $region14: #{tpu_custom_call.1} parent=11 // pred_check_branch
          %139 = sbr.rel (%p137) target = $region16
        $region15: #{tpu_custom_call.1} parent=11 // pred_region
          _
        $region16: #{tpu_custom_call.1} parent=11 // pred_fallthru
          _
        // Predicated region
        $region17: #{tpu_custom_call.1} parent=11 // pred_check
          %p140 = pneg %p94
        $region18: #{tpu_custom_call.1} parent=11 // pred_check_branch
          %142 = sbr.rel (%p140) target = $region20
        $region19: #{tpu_custom_call.1} parent=11 // pred_region
          _
        $region20: #{tpu_custom_call.1} parent=11 // pred_fallthru
          _
      $region12: #{tpu_custom_call.1} parent=5 // pred_fallthru
        _
      %p143 = scmp.lt.s32.totalorder %s12, 2
      // Predicated region
      $region21: #{tpu_custom_call.1} parent=5 // pred_check
        %p144 = pneg %p143
      $region22: #{tpu_custom_call.1} parent=5 // pred_check_branch
        %146 = sbr.rel (%p144) target = $region24
      $region23: #{tpu_custom_call.1} parent=5 // pred_region
        // Predicated region
        $region25: #{tpu_custom_call.1} parent=23 // pred_check
          %p147 = pneg %p46
        $region26: #{tpu_custom_call.1} parent=23 // pred_check_branch
          %149 = sbr.rel (%p147) target = $region28
        $region27: #{tpu_custom_call.1} parent=23 // pred_region
          %s150 = smul.u32 4, %s20
          %p151 = scmp.lt.s32.totalorder %s19, 1
          %s152 = scalar_select %p151, %s19, 1
          %p153 = scmp.lt.s32.totalorder %s150, 3
          %s154 = scalar_select %p153, %s150, 3
          %s155 = smul.addr %s152, 56
          %s156 = sadd.s32 %s154, %s155
          %s157 = smul.addr %s156, 8
          %s158 = scalar_lea.vmem %s0, %s157
          %s159 = smul.u32 4, %s20
        $region28: #{tpu_custom_call.1} parent=23 // pred_fallthru
          _
      $region24: #{tpu_custom_call.1} parent=5 // pred_fallthru
        _
      %p160 = scmp.le.s32.totalorder 1, %s12
      %p161 = scmp.lt.s32.totalorder %s12, 3
      %p162 = pnand %p160, %p161
      %p163 = pneg %p162
      // Predicated region
      $region29: #{tpu_custom_call.1} parent=5 // pred_check
        _
      $region30: #{tpu_custom_call.1} parent=5 // pred_check_branch
        %165 = sbr.rel (%p162) target = $region32
      $region31: #{tpu_custom_call.1} parent=5 // pred_region
        %s166 = ssub.s32 %s12, 1
        %s167 = smul.u32 4, %s22
        %p168 = scmp.lt.s32.totalorder %s21, 1
        %s169 = scalar_select %p168, %s21, 1
        %p170 = scmp.lt.s32.totalorder %s167, 3
        %s171 = scalar_select %p170, %s167, 3
        %s172 = smul.addr %s169, 56
        %s173 = sadd.s32 %s171, %s172
        %s174 = smul.addr %s173, 8
        %s175 = scalar_lea.vmem %s0, %s174
        %p176 = pneg %p52
        %p177 = pneg %p49
        %p178 = pneg %p73
        %p179 = pneg %p70
        %p180 = pneg %p94
        %p181 = pneg %p91
        %p182 = pneg %p122
        %p183 = pneg %p119
        %s184 = sand.u32 %s109, 1
        %s185 = scalar_lea.sflag [#allocation3], %s184
        %s186 = sand.u32 %s109, 1
        %s187 = smul.addr %s186, 32
        %s188 = scalar_lea.vmem [#allocation2], %s187
        %s189 = smul.u32 4, %s22
        %p190 = scmp.lt.s32.totalorder %s21, 1
        %s191 = scalar_select %p190, %s21, 1
        %p192 = scmp.lt.s32.totalorder %s189, 3
        %s193 = scalar_select %p192, %s189, 3
        %s194 = smul.addr %s191, 56
        %s195 = sadd.s32 %s193, %s194
        %s196 = smul.addr %s195, 8
        %s197 = scalar_lea.vmem %s0, %s196
        %s198 = smul.u32 4, %s22
        %s199 = smul.u32 4, %s22
        %v200 = vld [vmem:[%s1] sm:$0xff]
        %v201 = vld [vmem:[%s197] sm:$0xff]
        %v202 = vld [vmem:[%s197 + $0x8] sm:$0xff]
        %v203 = vld [vmem:[%s197 + $0x10] sm:$0xff]
        %v204 = vld [vmem:[%s197 + $0x18] sm:$0xff]
        %v205 = vld [vmem:[%s197 + $0x20] sm:$0xff]
        %v206 = vld [vmem:[%s197 + $0x28] sm:$0xff]
        %v207 = vld [vmem:[%s197 + $0x30] sm:$0xff]
        %v208 = vld [vmem:[%s197 + $0x38] sm:$0xff]
        %v209 = vld [vmem:[%s197 + $0x40] sm:$0xff]
        %v210 = vld [vmem:[%s197 + $0x48] sm:$0xff]
        %v211 = vld [vmem:[%s197 + $0x50] sm:$0xff]
        %v212 = vld [vmem:[%s197 + $0x58] sm:$0xff]
        %v213 = vld [vmem:[%s197 + $0x60] sm:$0xff]
        %v214 = vld [vmem:[%s197 + $0x68] sm:$0xff]
        %v215 = vld [vmem:[%s197 + $0x70] sm:$0xff]
        %v216 = vld [vmem:[%s197 + $0x78] sm:$0xff]
        %v217 = vld [vmem:[%s197 + $0x80] sm:$0xff]
        %v218 = vld [vmem:[%s197 + $0x88] sm:$0xff]
        %v219 = vld [vmem:[%s197 + $0x90] sm:$0xff]
        %v220 = vld [vmem:[%s197 + $0x98] sm:$0xff]
        %v221 = vld [vmem:[%s197 + $0xa0] sm:$0xff]
        %v222 = vld [vmem:[%s197 + $0xa8] sm:$0xff]
        %v223 = vld [vmem:[%s197 + $0xb0] sm:$0xff]
        %v224 = vld [vmem:[%s197 + $0xb8] sm:$0xff]
        %v225 = vld [vmem:[%s197 + $0xc0] sm:$0xff]
        %v226 = vld [vmem:[%s197 + $0xc8] sm:$0xff]
        %v227 = vld [vmem:[%s197 + $0xd0] sm:$0xff]
        %v228 = vld [vmem:[%s197 + $0xd8] sm:$0xff]
        %v229 = vld [vmem:[%s197 + $0xe0] sm:$0xff]
        %v230 = vld [vmem:[%s197 + $0xe8] sm:$0xff]
        %v231 = vld [vmem:[%s197 + $0xf0] sm:$0xff]
        %v232 = vld [vmem:[%s197 + $0xf8] sm:$0xff]
        %v233 = vld [vmem:[%s197 + $0x100] sm:$0xff]
        %v234 = vld [vmem:[%s197 + $0x108] sm:$0xff]
        %v235 = vld [vmem:[%s197 + $0x110] sm:$0xff]
        %v236 = vld [vmem:[%s197 + $0x118] sm:$0xff]
        %v237 = vld [vmem:[%s197 + $0x120] sm:$0xff]
        %v238 = vld [vmem:[%s197 + $0x128] sm:$0xff]
        %v239 = vld [vmem:[%s197 + $0x130] sm:$0xff]
        %v240 = vld [vmem:[%s197 + $0x138] sm:$0xff]
        %v241 = vld [vmem:[%s197 + $0x140] sm:$0xff]
        %v242 = vld [vmem:[%s197 + $0x148] sm:$0xff]
        %v243 = vld [vmem:[%s197 + $0x150] sm:$0xff]
        %v244 = vld [vmem:[%s197 + $0x158] sm:$0xff]
        %v245 = vld [vmem:[%s197 + $0x160] sm:$0xff]
        %v246 = vld [vmem:[%s197 + $0x168] sm:$0xff]
        %v247 = vld [vmem:[%s197 + $0x170] sm:$0xff]
        %v248 = vld [vmem:[%s197 + $0x178] sm:$0xff]
        %v249 = vld [vmem:[%s197 + $0x180] sm:$0xff]
        %v250 = vld [vmem:[%s197 + $0x188] sm:$0xff]
        %v251 = vld [vmem:[%s197 + $0x190] sm:$0xff]
        %v252 = vld [vmem:[%s197 + $0x198] sm:$0xff]
        %v253 = vld [vmem:[%s197 + $0x1a0] sm:$0xf]
        %v254 = vld [vmem:[%s197 + $0x1a8] sm:$0xf]
        %v255 = vld [vmem:[%s197 + $0x1b0] sm:$0xf]
        %v256 = vld [vmem:[%s197 + $0x1b8] sm:$0xf]
        %v257 = vld [vmem:[%s2] sm:$0xff]
        %259 = vset.pattern.permute.xlu0 0
        %260 = vperm.xlu0 %259, %v257
        %v261 = vpop.permute.xlu0 %260
        %vm263 = vcmask 883712
        %v265 = vsel %vm263, %v200, 0
        %vm267 = vcmask 1043456
        %v269 = vsel %vm267, %v253, 0
        %v272 = vsel %vm267, %v254, 0
        %v275 = vsel %vm267, %v255, 0
        %v278 = vsel %vm267, %v256, 0
        %280 = vmatprep.subr.mxu0 0.0
        %281 = vmatpush1.msra.mxu0 0.0
        %282 = vmatprep.subr.mxu0 0.0
        %283 = vmatpush1.msra.mxu0 0.0
        %284 = vmatprep.subr.mxu0 %v272
        %285 = vmatpush1.msra.mxu0 %v269
        %286 = vmatprep.subr.mxu0 %v250
        %287 = vmatpush1.msra.mxu0 %v249
        %288 = vmatprep.subr.mxu0 %v246
        %289 = vmatpush1.msra.mxu0 %v245
        %290 = vmatprep.subr.mxu0 %v242
        %291 = vmatpush1.msra.mxu0 %v241
        %292 = vmatprep.subr.mxu0 %v238
        %293 = vmatpush1.msra.mxu0 %v237
        %294 = vmatprep.subr.mxu0 %v234
        %295 = vmatpush1.msra.mxu0 %v233
        %296 = vmatprep.subr.mxu0 %v230
        %297 = vmatpush1.msra.mxu0 %v229
        %298 = vmatprep.subr.mxu0 %v226
        %299 = vmatpush1.msra.mxu0 %v225
        %300 = vmatprep.subr.mxu0 %v222
        %301 = vmatpush1.msra.mxu0 %v221
        %302 = vmatprep.subr.mxu0 %v218
        %303 = vmatpush1.msra.mxu0 %v217
        %304 = vmatprep.subr.mxu0 %v214
        %305 = vmatpush1.msra.mxu0 %v213
        %306 = vmatprep.subr.mxu0 %v210
        %307 = vmatpush1.msra.mxu0 %v209
        %308 = vmatprep.subr.mxu0 %v206
        %309 = vmatpush1.msra.mxu0 %v205
        %310 = vmatprep.subr.mxu0 %v202
        %311 = vmatpush1.msra.mxu0 %v201
        %312 = vmatprep.subr.mxu0 0.0
        %313 = vmatpush2.msra.mxu0 0.0
        %314 = vmatprep.subr.mxu0 0.0
        %315 = vmatpush2.msra.mxu0 0.0
        %316 = vmatprep.subr.mxu0 0.0
        %317 = vmatpush2.msra.mxu0 0.0
        %318 = vmatprep.subr.mxu0 0.0
        %319 = vmatpush2.msra.mxu0 0.0
        %320 = vmatprep.subr.mxu0 0.0
        %321 = vmatpush2.msra.mxu0 0.0
        %322 = vmatprep.subr.mxu0 0.0
        %323 = vmatpush2.msra.mxu0 0.0
        %324 = vmatprep.subr.mxu0 0.0
        %325 = vmatpush2.msra.mxu0 0.0
        %326 = vmatprep.subr.mxu0 0.0
        %327 = vmatpush2.msra.mxu0 0.0
        %328 = vmatprep.subr.mxu0 0.0
        %329 = vmatpush2.msra.mxu0 0.0
        %330 = vmatprep.subr.mxu0 0.0
        %331 = vmatpush2.msra.mxu0 0.0
        %332 = vmatprep.subr.mxu0 0.0
        %333 = vmatpush2.msra.mxu0 0.0
        %334 = vmatprep.subr.mxu0 0.0
        %335 = vmatpush2.msra.mxu0 0.0
        %336 = vmatprep.subr.mxu0 0.0
        %337 = vmatpush2.msra.mxu0 0.0
        %338 = vmatprep.subr.mxu0 0.0
        %339 = vmatpush2.msra.mxu0 0.0
        %340 = vmatprep.subr.mxu0 0.0
        %341 = vmatpush2.msra.mxu0 0.0
        %342 = vmatprep.subr.mxu0 0.0
        %343 = vmatpush2.msra.mxu0 0.0
        %344 = vmatprep.mubr.f32.mxu0 0.0
        %345 = vmatmul.mubr.f32.gmra.mxu0 %v265
        %v346 = vpop.f32.mrf.mxu0
        %v347 = vadd.f32 %v261, %v346
        %v348 = vpop.f32.mrf.mxu0
        %v349 = vadd.f32 %v261, %v348
        %350 = vdwg.mxu0
        %351 = vmatprep.subr.mxu0 0.0
        %352 = vmatpush1.msra.mxu0 0.0
        %353 = vmatprep.subr.mxu0 0.0
        %354 = vmatpush1.msra.mxu0 0.0
        %355 = vmatprep.subr.mxu0 %v278
        %356 = vmatpush1.msra.mxu0 %v275
        %357 = vmatprep.subr.mxu0 %v252
        %358 = vmatpush1.msra.mxu0 %v251
        %359 = vmatprep.subr.mxu0 %v248
        %360 = vmatpush1.msra.mxu0 %v247
        %361 = vmatprep.subr.mxu0 %v244
        %362 = vmatpush1.msra.mxu0 %v243
        %363 = vmatprep.subr.mxu0 %v240
        %364 = vmatpush1.msra.mxu0 %v239
        %365 = vmatprep.subr.mxu0 %v236
        %366 = vmatpush1.msra.mxu0 %v235
        %367 = vmatprep.subr.mxu0 %v232
        %368 = vmatpush1.msra.mxu0 %v231
        %369 = vmatprep.subr.mxu0 %v228
        %370 = vmatpush1.msra.mxu0 %v227
        %371 = vmatprep.subr.mxu0 %v224
        %372 = vmatpush1.msra.mxu0 %v223
        %373 = vmatprep.subr.mxu0 %v220
        %374 = vmatpush1.msra.mxu0 %v219
        %375 = vmatprep.subr.mxu0 %v216
        %376 = vmatpush1.msra.mxu0 %v215
        %377 = vmatprep.subr.mxu0 %v212
        %378 = vmatpush1.msra.mxu0 %v211
        %379 = vmatprep.subr.mxu0 %v208
        %380 = vmatpush1.msra.mxu0 %v207
        %381 = vmatprep.subr.mxu0 %v204
        %382 = vmatpush1.msra.mxu0 %v203
        %383 = vmatprep.subr.mxu0 0.0
        %384 = vmatpush2.msra.mxu0 0.0
        %385 = vmatprep.subr.mxu0 0.0
        %386 = vmatpush2.msra.mxu0 0.0
        %387 = vmatprep.subr.mxu0 0.0
        %388 = vmatpush2.msra.mxu0 0.0
        %389 = vmatprep.subr.mxu0 0.0
        %390 = vmatpush2.msra.mxu0 0.0
        %391 = vmatprep.subr.mxu0 0.0
        %392 = vmatpush2.msra.mxu0 0.0
        %393 = vmatprep.subr.mxu0 0.0
        %394 = vmatpush2.msra.mxu0 0.0
        %395 = vmatprep.subr.mxu0 0.0
        %396 = vmatpush2.msra.mxu0 0.0
        %397 = vmatprep.subr.mxu0 0.0
        %398 = vmatpush2.msra.mxu0 0.0
        %399 = vmatprep.subr.mxu0 0.0
        %400 = vmatpush2.msra.mxu0 0.0
        %401 = vmatprep.subr.mxu0 0.0
        %402 = vmatpush2.msra.mxu0 0.0
        %403 = vmatprep.subr.mxu0 0.0
        %404 = vmatpush2.msra.mxu0 0.0
        %405 = vmatprep.subr.mxu0 0.0
        %406 = vmatpush2.msra.mxu0 0.0
        %407 = vmatprep.subr.mxu0 0.0
        %408 = vmatpush2.msra.mxu0 0.0
        %409 = vmatprep.subr.mxu0 0.0
        %410 = vmatpush2.msra.mxu0 0.0
        %411 = vmatprep.subr.mxu0 0.0
        %412 = vmatpush2.msra.mxu0 0.0
        %413 = vmatprep.subr.mxu0 0.0
        %414 = vmatpush2.msra.mxu0 0.0
        %415 = vmatprep.mubr.f32.mxu0 0.0
        %416 = vmatmul.mubr.f32.gmra.mxu0 %v265
        %v417 = vpop.f32.mrf.mxu0
        %v418 = vadd.f32 %v261, %v417
        %v419 = vpop.f32.mrf.mxu0
        %v420 = vadd.f32 %v261, %v419
        %421 = vdwg.mxu0
        %v422 = vmax.f32 %v347, 0.0
        %v423 = vmax.f32 %v349, 0.0
        %v424 = vmax.f32 %v418, 0.0
        %v425 = vmax.f32 %v420, 0.0
        %426 = vst [vmem:[%s188] sm:$0xff] %v422
        %427 = vst [vmem:[%s188 + $0x8] sm:$0xff] %v423
        %428 = vst [vmem:[%s188 + $0x10] sm:$0xff] %v424
        %429 = vst [vmem:[%s188 + $0x18] sm:$0xff] %v425
        %s430 = sand.u32 %s109, 1
        %s431 = scalar_lea.sflag [#allocation3], %s430
        %s432 = sand.u32 %s109, 1
        %s433 = smul.addr %s432, 32
        %s434 = scalar_lea.vmem [#allocation2], %s433
        // Predicated region
        $region33: #{tpu_custom_call.1} parent=31 // pred_check
          %p435 = pneg %p119
        $region34: #{tpu_custom_call.1} parent=31 // pred_check_branch
          %437 = sbr.rel (%p435) target = $region36
        $region35: #{tpu_custom_call.1} parent=31 // pred_region
          %s438 = smul.u32 4, %s22
          %s440 = ssub.s32 512, 512
          %441 = vsyncadd %s431, %s440
          %s442 = smul.addr %s21, 4
          %s443 = sadd.s32 %s438, %s442
          %s444 = smul.addr %s443, 128
          %s445 = scalar_lea.hbm %s3, %s444
          %s447 = sshll.u32 %s434, 4
          %s448 = int_to_ptr.vmem [resolvable:$true] %s447
          %450 = dma.vmem_to_hbm [thread:$0]  %s448, 512, %s445, %s431
        $region36: #{tpu_custom_call.1} parent=31 // pred_fallthru
          _
      $region32: #{tpu_custom_call.1} parent=5 // pred_fallthru
        _
      %p451 = scmp.le.s32.totalorder 2, %s12
      // Predicated region
      $region37: #{tpu_custom_call.1} parent=5 // pred_check
        %p452 = pneg %p451
      $region38: #{tpu_custom_call.1} parent=5 // pred_check_branch
        %454 = sbr.rel (%p452) target = $region40
      $region39: #{tpu_custom_call.1} parent=5 // pred_region
        %s455 = ssub.s32 %s12, 2
        // Predicated region
        $region41: #{tpu_custom_call.1} parent=39 // pred_check
          %p456 = pneg %p125
        $region42: #{tpu_custom_call.1} parent=39 // pred_check_branch
          %458 = sbr.rel (%p456) target = $region44
        $region43: #{tpu_custom_call.1} parent=39 // pred_region
          %s459 = sand.u32 %s110, 1
          %s460 = scalar_lea.sflag [#allocation3], %s459
          %s461 = sand.u32 %s110, 1
          %s462 = smul.addr %s461, 32
          %s463 = scalar_lea.vmem [#allocation2], %s462
          %464 = dma.done %s460, 512
        $region44: #{tpu_custom_call.1} parent=39 // pred_fallthru
          _
      $region40: #{tpu_custom_call.1} parent=5 // pred_fallthru
        _
    $region6: #{tpu_custom_call.1} parent=1 // loop_footer
      %s16 = sadd.s32 1, %s12
    $region7: #{tpu_custom_call.1} parent=1 // loop_footer_branch
      %11 = sbr.rel target = $region3
    $region8: #{tpu_custom_call.1} parent=1 // loop_exit
      _
    %465 = vsyncpa [#allocation3], 1
    %s466 = scalar_lea.sflag [#allocation3], 1
    %467 = vsyncpa %s466, 1

</llo_original>
